<compile_context>
chip_gen: v7x
topology: tpu7x:2x2x1
jax: 0.10.0
libtpu: 0.0.40
codegen_flags: <defaults>
</compile_context>

<pallas_src>
import functools

import jax
import jax.numpy as jnp
from jax.experimental import pallas as pl
from jax.experimental.pallas import tpu as pltpu


def _round_up(x, m):
    return ((x + m - 1) // m) * m


def _focal_loss_kernel(logits_ref, target_ref, *rest, gamma, batch, tile_b,
                       has_alpha):
    """One batch tile of focal loss; writes this tile's partial sum.

    logits_ref: [tile_b, C] float (last grid block may contain garbage rows)
    target_ref: [tile_b, 1]  int32
    alpha_ref:  [1, C]       float32   (only when has_alpha)
    out_ref:    [1, 8, 128]  float32   per-tile partial sum, broadcast-filled
    """
    if has_alpha:
        alpha_ref, out_ref = rest
    else:
        (out_ref,) = rest

    pid = pl.program_id(0)

    logits = logits_ref[...].astype(jnp.float32)               # [tile_b, C]
    tgt = target_ref[...]                                      # [tile_b, 1]

    # Numerically stable log-softmax over the class axis.
    m = jnp.max(logits, axis=-1, keepdims=True)                # [tile_b, 1]
    z = logits - m                                             # [tile_b, C]
    lse = jnp.log(jnp.sum(jnp.exp(z), axis=-1, keepdims=True))  # [tile_b, 1]

    # Target-class gather via a boolean mask (no per-row dynamic gather on the
    # vector unit; no float one-hot materialized).
    cls = jax.lax.broadcasted_iota(jnp.int32, logits.shape, dimension=1)
    mask = cls == tgt                                          # bool [tile_b,C]

    z_t = jnp.sum(jnp.where(mask, z, 0.0), axis=-1, keepdims=True)
    log_pt = z_t - lse                                         # log p_t
    ce = -log_pt                                               # cross-entropy
    pt = jnp.exp(log_pt)

    # (1 - pt) ** gamma; clamp the base so pt > 1 by one ulp cannot NaN.
    w = jnp.maximum(1.0 - pt, 0.0)
    g = float(gamma)
    if g == int(g) and int(g) >= 0:
        gi = int(g)
        if gi == 0:
            wpow = jnp.ones_like(w)
        else:
            wpow = w
            for _ in range(gi - 1):          # plain VPU multiplies
                wpow = wpow * w
    else:
        wpow = jnp.power(w, jnp.float32(g))

    focal = wpow * ce                                          # [tile_b, 1]
    if has_alpha:
        alpha = alpha_ref[...].astype(jnp.float32)             # [1, C]
        alpha_t = jnp.sum(jnp.where(mask, alpha, 0.0), axis=-1, keepdims=True)
        focal = alpha_t * focal

    # Mask the ragged last block: rows >= batch hold garbage (possibly NaN),
    # jnp.where selects 0.0 regardless of the garbage value.
    row = pid * tile_b + jax.lax.broadcasted_iota(jnp.int32, focal.shape,
                                                  dimension=0)
    partial = jnp.sum(jnp.where(row < batch, focal, 0.0))

    # Lane-dense write of this tile's partial sum (wrapper reads [:, 0, 0]).
    out_ref[...] = jnp.zeros(out_ref.shape, dtype=jnp.float32) + partial


def focal_loss(logits, target, gamma=2.0, alpha=None, tile_b=None):
    """Pallas TPU focal loss (mean reduction), matching the PyTorch module.

    Args:
      logits: [B, C] float array (f32 or bf16) of predicted logits.
      target: [B] int array of class indices.
      gamma:  focusing parameter (python float, baked into the kernel).
      alpha:  optional [C] float array of class weights (None -> no weighting).
      tile_b: optional batch-tile override (multiple of 8).

    Returns:
      scalar float32 loss.
    """
    B, C = logits.shape
    itemsize = jnp.dtype(logits.dtype).itemsize
    C_lanes = _round_up(C, 128)  # VMEM lane footprint of one logits row

    if tile_b is None:
        # Working-set budget per tile (fits comfortably under the 48 MiB scoped
        # limit and v7x's 64 MiB physical VMEM):
        #   2x double-buffered logits input + ~5 full-width f32/i32 temporaries
        #   + 2x lane-padded (tile_b, 1) int32 target buffers.
        budget = 24 * 1024 * 1024
        bytes_per_row = (2 * C_lanes * itemsize
                         + 5 * C_lanes * 4
                         + 2 * 128 * 4)
        tile_b = max(8, budget // bytes_per_row)
        if tile_b >= 128:
            tile_b = (tile_b // 128) * 128
        else:
            tile_b = (tile_b // 8) * 8
        tile_b = min(tile_b, 4096)
    else:
        tile_b = max(8, (int(tile_b) // 8) * 8)
    tile_b = min(tile_b, _round_up(B, 8))

    grid_n = (B + tile_b - 1) // tile_b

    target2d = target.astype(jnp.int32).reshape(B, 1)

    args = [logits, target2d]
    in_specs = [
        pl.BlockSpec((tile_b, C), lambda i: (i, 0)),   # logits tile (no pad)
        pl.BlockSpec((tile_b, 1), lambda i: (i, 0)),   # target tile
    ]
    has_alpha = alpha is not None
    if has_alpha:
        alpha_arr = jnp.asarray(alpha, dtype=jnp.float32).reshape(1, C)
        args.append(alpha_arr)
        in_specs.append(pl.BlockSpec((1, C), lambda i: (0, 0)))  # resident

    kernel = functools.partial(_focal_loss_kernel, gamma=float(gamma),
                               batch=B, tile_b=tile_b, has_alpha=has_alpha)

    partials = pl.pallas_call(
        kernel,
        out_shape=jax.ShapeDtypeStruct((grid_n, 8, 128), jnp.float32),
        grid=(grid_n,),
        in_specs=in_specs,
        out_specs=pl.BlockSpec((1, 8, 128), lambda i: (i, 0, 0)),
        compiler_params=pltpu.CompilerParams(
            dimension_semantics=("parallel",),   # independent per-tile sums
            vmem_limit_bytes=48 * 1024 * 1024,
        ),
    )(*args)

    return jnp.sum(partials[:, 0, 0]) / jnp.float32(B)


def _reference_focal_loss(logits, target, gamma=2.0, alpha=None):
    """Pure-JAX reference matching the PyTorch module semantics."""
    logp = jax.nn.log_softmax(logits.astype(jnp.float32), axis=-1)
    ce = -jnp.take_along_axis(logp, target[:, None].astype(jnp.int32),
                              axis=-1)[:, 0]
    pt = jnp.exp(-ce)
    if alpha is not None:
        alpha_t = jnp.asarray(alpha, jnp.float32)[target]
        focal = alpha_t * (1.0 - pt) ** gamma * ce
    else:
        focal = (1.0 - pt) ** gamma * ce
    return jnp.mean(focal)


if __name__ == "__main__":
    key = jax.random.PRNGKey(0)
    k1, k2, k3, k4, k5 = jax.random.split(key, 5)

    # Test 1: module defaults (gamma=2.0, alpha=None), small lane-ragged C.
    B, C = 8, 32
    logits = jax.random.normal(k1, (B, C), dtype=jnp.float32)
    target = jax.random.randint(k2, (B,), 0, C, dtype=jnp.int32)
    loss = jax.block_until_ready(focal_loss(logits, target))
    ref = _reference_focal_loss(logits, target)
    assert jnp.allclose(loss, ref, rtol=1e-5, atol=1e-6), (loss, ref)

    # Test 2: class weights, C not a multiple of 128, ragged batch
    # (B=10, tile_b=8 -> 2 grid steps; 6 garbage rows masked in the last
    # block), integer gamma=3 via VPU multiplies.
    B2, C2 = 10, 48
    logits2 = jax.random.normal(k3, (B2, C2), dtype=jnp.float32)
    target2 = jax.random.randint(k4, (B2,), 0, C2, dtype=jnp.int32)
    alpha2 = jax.random.uniform(k5, (C2,), minval=0.25, maxval=1.0,
                                dtype=jnp.float32)
    loss2 = jax.block_until_ready(
        focal_loss(logits2, target2, gamma=3.0, alpha=alpha2, tile_b=8))
    ref2 = _reference_focal_loss(logits2, target2, gamma=3.0, alpha=alpha2)
    assert jnp.allclose(loss2, ref2, rtol=1e-5, atol=1e-6), (loss2, ref2)

    # Test 3: bf16 logits (kernel casts to f32 internally), non-integer gamma.
    B3, C3 = 16, 32
    logits3 = jax.random.normal(k1, (B3, C3), dtype=jnp.bfloat16)
    target3 = jax.random.randint(k2, (B3,), 0, C3, dtype=jnp.int32)
    loss3 = jax.block_until_ready(focal_loss(logits3, target3, gamma=1.5))
    ref3 = _reference_focal_loss(logits3, target3, gamma=1.5)
    assert jnp.allclose(loss3, ref3, rtol=1e-4, atol=1e-5), (loss3, ref3)

    print("KERNEL_OK")
</pallas_src>

<mosaic_0001>
module attributes {stable_mosaic.version = 11 : i64} {
  func.func @_focal_loss_kernel(%arg0: i32, %arg1: memref<8x32xf32, #tpu.memory_space<vmem>>, %arg2: memref<8x1xi32, #tpu.memory_space<vmem>>, %arg3: memref<1x8x128xf32, #tpu.memory_space<vmem>>) attributes {dimension_semantics = [#tpu.dimension_semantics<parallel>], iteration_bounds = array<i64: 1>, scalar_prefetch = 0 : i64, scratch_operands = 0 : i64, tpu.core_type = #tpu.core_type<tc>, window_params = [{transform_indices = @transform_0, window_bounds = array<i64: 8, 32>}, {transform_indices = @transform_1, window_bounds = array<i64: 8, 1>}, {transform_indices = @transform_2, window_bounds = array<i64: 1, 8, 128>}]} {
    %c0 = arith.constant 0 : index
    %c0_0 = arith.constant 0 : index
    %0 = vector.load %arg1[%c0, %c0_0] : memref<8x32xf32, #tpu.memory_space<vmem>>, vector<8x32xf32>
    %c0_1 = arith.constant 0 : index
    %c0_2 = arith.constant 0 : index
    %1 = vector.load %arg2[%c0_1, %c0_2] : memref<8x1xi32, #tpu.memory_space<vmem>>, vector<8x1xi32>
    %cst = arith.constant dense<0xFF800000> : vector<8xf32>
    %2 = vector.multi_reduction <maximumf>, %0, %cst [1] : vector<8x32xf32> to vector<8xf32>
    %3 = vector.shape_cast %2 : vector<8xf32> to vector<8x1xf32>
    %4 = vector.broadcast %3 : vector<8x1xf32> to vector<8x32xf32>
    %5 = arith.subf %0, %4 : vector<8x32xf32>
    %6 = math.exp %5 : vector<8x32xf32>
    %cst_3 = arith.constant dense<0.000000e+00> : vector<8xf32>
    %7 = vector.multi_reduction <add>, %6, %cst_3 [1] : vector<8x32xf32> to vector<8xf32>
    %8 = vector.shape_cast %7 : vector<8xf32> to vector<8x1xf32>
    %9 = math.log %8 : vector<8x1xf32>
    %10 = tpu.iota {dimensions = array<i32: 1>} : vector<8x32xi32>
    %11 = vector.broadcast %1 : vector<8x1xi32> to vector<8x32xi32>
    %12 = arith.cmpi eq, %10, %11 : vector<8x32xi32>
    %cst_4 = arith.constant 0.000000e+00 : f32
    %13 = vector.broadcast %cst_4 : f32 to vector<8x32xf32>
    %14 = arith.select %12, %5, %13 : vector<8x32xi1>, vector<8x32xf32>
    %cst_5 = arith.constant dense<0.000000e+00> : vector<8xf32>
    %15 = vector.multi_reduction <add>, %14, %cst_5 [1] : vector<8x32xf32> to vector<8xf32>
    %16 = vector.shape_cast %15 : vector<8xf32> to vector<8x1xf32>
    %17 = arith.subf %16, %9 : vector<8x1xf32>
    %cst_6 = arith.constant 0.000000e+00 : f32
    %18 = vector.broadcast %cst_6 : f32 to vector<8x1xf32>
    %19 = arith.subf %18, %17 : vector<8x1xf32>
    %20 = math.exp %17 : vector<8x1xf32>
    %cst_7 = arith.constant 1.000000e+00 : f32
    %21 = vector.broadcast %cst_7 : f32 to vector<8x1xf32>
    %22 = arith.subf %21, %20 : vector<8x1xf32>
    %cst_8 = arith.constant 0.000000e+00 : f32
    %23 = vector.broadcast %cst_8 : f32 to vector<8x1xf32>
    %24 = arith.maximumf %22, %23 : vector<8x1xf32>
    %25 = arith.mulf %24, %24 : vector<8x1xf32>
    %26 = arith.mulf %25, %19 : vector<8x1xf32>
    %c8_i32 = arith.constant 8 : i32
    %27 = arith.muli %arg0, %c8_i32 : i32
    %28 = tpu.iota {dimensions = array<i32: 0>} : vector<8x1xi32>
    %29 = vector.broadcast %27 : i32 to vector<8x1xi32>
    %30 = arith.addi %29, %28 : vector<8x1xi32>
    %c8_i32_9 = arith.constant 8 : i32
    %31 = vector.broadcast %c8_i32_9 : i32 to vector<8x1xi32>
    %32 = arith.cmpi slt, %30, %31 : vector<8x1xi32>
    %cst_10 = arith.constant 0.000000e+00 : f32
    %33 = vector.broadcast %cst_10 : f32 to vector<8x1xf32>
    %34 = arith.select %32, %26, %33 : vector<8x1xi1>, vector<8x1xf32>
    %35 = vector.shape_cast %34 : vector<8x1xf32> to vector<1x8x1xf32>
    %cst_11 = arith.constant dense<0.000000e+00> : vector<1xf32>
    %36 = vector.multi_reduction <add>, %35, %cst_11 [1, 2] : vector<1x8x1xf32> to vector<1xf32>
    %37 = vector.shape_cast %36 : vector<1xf32> to vector<1x1x1xf32>
    %38 = vector.extract %37[0, 0, 0] : f32 from vector<1x1x1xf32>
    %cst_12 = arith.constant 0.000000e+00 : f32
    %39 = vector.broadcast %cst_12 : f32 to vector<1x8x128xf32>
    %40 = vector.broadcast %38 : f32 to vector<1x8x128xf32>
    %41 = arith.addf %39, %40 : vector<1x8x128xf32>
    %c0_13 = arith.constant 0 : index
    %c0_14 = arith.constant 0 : index
    %c0_15 = arith.constant 0 : index
    %42 = vector.load %arg3[%c0_13, %c0_14, %c0_15] : memref<1x8x128xf32, #tpu.memory_space<vmem>>, vector<1x8x128xf32>
    tpu.vector_store %arg3[%c0_13, %c0_14, %c0_15], %41 {strides = array<i32>} : memref<1x8x128xf32, #tpu.memory_space<vmem>>, vector<1x8x128xf32>,
    return
  }
  func.func @transform_0(%arg0: i32) -> (i32, i32) {
    %c0_i32 = arith.constant 0 : i32
    %c0_i32_0 = arith.constant 0 : i32
    return %arg0, %c0_i32 : i32, i32
  }
  func.func @transform_1(%arg0: i32) -> (i32, i32) {
    %c0_i32 = arith.constant 0 : i32
    %c0_i32_0 = arith.constant 0 : i32
    return %arg0, %c0_i32 : i32, i32
  }
  func.func @transform_2(%arg0: i32) -> (i32, i32, i32) {
    %c0_i32 = arith.constant 0 : i32
    %c0_i32_0 = arith.constant 0 : i32
    %c0_i32_1 = arith.constant 0 : i32
    return %arg0, %c0_i32, %c0_i32_0 : i32, i32, i32
  }
}

</mosaic_0001>

<llo_original>
// kernel: tpu_custom_call.1
$region0: #{tpu_custom_call.1}
  #allocation0 [shape = 'u32[]', space=smem, size = 0x4, offset = 0x4, fixed_abs, tag = 'smem constant byte address 0x4 - core index']
  #allocation1 [shape = 'u32[144,128]{1,0:T(1,128)}', space=vmem, size = 0x12000, scoped, tag = 'internal scratch']
  %s0 = inlined_call_operand.vmem [shape: f32[8,32], index: 0, kind: input, shape index: {}]
  %s1 = inlined_call_operand.vmem [shape: s32[8,1], index: 1, kind: input, shape index: {}]
  %s2 = inlined_call_operand.hbm [shape: f32[1,8,128], index: 2, kind: output, shape index: {}]
  %s3 = sld [smem:[#allocation0]]
  $region18: #{tpu_custom_call.1} parent=0
    _
  %s5 = ssub.s32 1, %s3
  %s6 = scalar_select 0, %s5, %s3
  $region1: #{tpu_custom_call.1} parent=0
    #allocation2 [shape = 'u8[4096]{0}', space=vmem, size = 0x1000, scoped, tag = 'output window, operand 0, single buffered']
    #allocation3 [shape = 's32[1]{0}', space=sflag, size = 0x4, scoped, tag = 'scoped memory for tpu_custom_call.1']
    %7 = vsyncpa [#allocation3], 0
    // Predicated region
    $region2: #{tpu_custom_call.1} parent=1 // pred_check
      _
    $region3: #{tpu_custom_call.1} parent=1 // pred_check_branch
      %9 = sbr.rel (0) target = $region5
    $region4: #{tpu_custom_call.1} parent=1 // pred_region
      _
    $region5: #{tpu_custom_call.1} parent=1 // pred_fallthru
      _
    // Predicated region
    $region6: #{tpu_custom_call.1} parent=1 // pred_check
      _
    $region7: #{tpu_custom_call.1} parent=1 // pred_check_branch
      %11 = sbr.rel (0) target = $region9
    $region8: #{tpu_custom_call.1} parent=1 // pred_region
      _
    $region9: #{tpu_custom_call.1} parent=1 // pred_fallthru
      _
    %v12 = vld [vmem:[%s0] sm:$0xff]
    %v13 = vld [vmem:[%s1] sm:$0xff]
    %vm14 = vcmask 261120
    %v15 = vsel %vm14, %v12, -inf
    %16 = vmax.xlane.f32.xlu0 %v15
    %v17 = vpop.xlane.xlu0 %16
    %v18 = vsub.f32 %v12, %v17
    %v19 = vmul.f32 %v18, 1.442695
    %v20 = vpow.pop %v19
    %v21 = vsel %vm14, %v20, 0.0
    %22 = vadd.xlane.f32.xlu0 %v21
    %v23 = vpop.xlane.xlu0 %22
    %v24 = vlog2.pop %v23
    %v25 = vmul.f32 %v24, 0.6931472
    %v26 = vlaneseq
    %v27 = vand.u32 %v26, 127
    %28 = vset.pattern.permute.xlu0 0
    %29 = vperm.xlu0 %28, %v13
    %v30 = vpop.permute.xlu0 %29
    %vm31 = vcmp.eq.s32.totalorder %v27, %v30
    %v32 = vsel %vm31, %v18, 0.0
    %v33 = vsel %vm14, %v32, 0.0
    %34 = vadd.xlane.f32.xlu0 %v33
    %v35 = vpop.xlane.xlu0 %34
    %v36 = vsub.f32 %v35, %v25
    %v37 = vsub.f32 0.0, %v36
    %v38 = vmul.f32 %v36, 1.442695
    %v39 = vpow.pop %v38
    %v40 = vsub.f32 1.0, %v39
    %v41 = vmax.f32 %v40, 0.0
    %v42 = vmul.f32 %v41, %v41
    %v43 = vmul.f32 %v42, %v37
    %s44 = smul.u32 0, 8
    %v45 = vlaneseq
    %v46 = vshrl.u32 %v45, 7
    %v47 = vstv %s44
    %v48 = vadd.s32 %v47, %v46
    %vm49 = vcmp.lt.s32.totalorder %v48, 8
    %v50 = vsel %vm49, %v43, 0.0
    %vm51 = vcmask 7168
    %v52 = vsel %vm51, %v50, 0.0
    %53 = vadd.xlane.f32.xlu0 %v52
    %v54 = vpop.xlane.xlu0 %53
    %v55 = vrot.slane %v54, 4
    %v56 = vadd.f32 %v54, %v55
    %v57 = vrot.slane %v56, 2
    %v58 = vadd.f32 %v56, %v57
    %v59 = vrot.slane %v58, 1
    %v60 = vadd.f32 %v58, %v59
    %s61 = vtos %v60
    %v62 = vstv %s61
    %v63 = vadd.f32 %v62, 0.0
    %64 = vst [vmem:[#allocation2] sm:$0xff] %v63
    // Predicated region
    $region10: #{tpu_custom_call.1} parent=1 // pred_check
      _
    $region11: #{tpu_custom_call.1} parent=1 // pred_check_branch
      %66 = sbr.rel (0) target = $region13
    $region12: #{tpu_custom_call.1} parent=1 // pred_region
      %s68 = ssub.s32 128, 128
      %69 = vsyncadd [#allocation3], %s68
      %s71 = sshll.u32 [#allocation2], 4
      %s72 = int_to_ptr.vmem [resolvable:$true] %s71
      %74 = dma.vmem_to_hbm [thread:$0]  %s72, 128, %s2, [#allocation3]
    $region13: #{tpu_custom_call.1} parent=1 // pred_fallthru
      _
    // Predicated region
    $region14: #{tpu_custom_call.1} parent=1 // pred_check
      _
    $region15: #{tpu_custom_call.1} parent=1 // pred_check_branch
      %76 = sbr.rel (0) target = $region17
    $region16: #{tpu_custom_call.1} parent=1 // pred_region
      %77 = dma.done [#allocation3], 128
    $region17: #{tpu_custom_call.1} parent=1 // pred_fallthru
      _
    %78 = vsyncpa [#allocation3], 1

</llo_original>
